<compile_context>
chip_gen: v7x
topology: tpu7x:2x2x1
jax: 0.10.0
libtpu: 0.0.40
codegen_flags: <defaults>
</compile_context>

<pallas_src>
import functools

import jax
import jax.numpy as jnp
from jax.experimental import pallas as pl
from jax.experimental.pallas import tpu as pltpu


def _round_up(x, m):
    return ((x + m - 1) // m) * m


def _supcon_logden_kernel(xk_ref, xa_ref, sc_ref, logden_ref, m_acc, l_acc,
                          *, n_pad_keys):
    """Flash-style log-sum-exp over the key axis.

    grid = (anchor tiles i [parallel], key tiles j [arbitrary, innermost])
      xk_ref:     (tn, C)  key features                         (varies with j)
      xa_ref:     (C, tm)  anchor features^T, 1/temp pre-folded (varies with i)
      sc_ref:     (1, tm)  anchor self-similarity / temp        (varies with i)
      logden_ref: (1, tm)  log( sum_k exp(s_ka) - exp(self_a) )
      m_acc/l_acc:(1, tm)  running max / running exp-sum scratch
    """
    j = pl.program_id(1)

    @pl.when(j == 0)
    def _():
        m_acc[...] = jnp.full_like(m_acc, -jnp.inf)
        l_acc[...] = jnp.zeros_like(l_acc)

    # s[k, a] = <x_k, x_a> / temp. 1/temp is folded into the anchor operand and
    # the anchor operand is pre-transposed -> MXU-native matmul, lane-dense out.
    s = jnp.dot(xk_ref[...], xa_ref[...],
                preferred_element_type=jnp.float32)            # (tn, tm) f32

    # Online (flash-style) log-sum-exp accumulation over keys; numerically
    # stable for unnormalized features / small temperature.
    m_prev = m_acc[...]
    m_new = jnp.maximum(m_prev, jnp.max(s, axis=0, keepdims=True))   # (1, tm)
    p = jnp.exp(s - m_new)                                           # EUP stream
    l_acc[...] = jnp.exp(m_prev - m_new) * l_acc[...] + jnp.sum(p, axis=0,
                                                                keepdims=True)
    m_acc[...] = m_new

    @pl.when(j == pl.num_programs(1) - 1)
    def _():
        m = m_acc[...]
        # Subtract the self-contrast term and the contribution of zero-feature
        # key padding rows (each padded key contributed exp(0 - m)).
        den = l_acc[...] - jnp.exp(sc_ref[...] - m)
        if n_pad_keys:                                   # static python int
            den = den - float(n_pad_keys) * jnp.exp(-m)
        logden_ref[...] = m + jnp.log(den)


def supcon_seg_loss(features, labels, temperature=0.7, *,
                    tm=512, tn=2048, matmul_dtype=jnp.bfloat16,
                    num_classes=None, vmem_limit_bytes=48 * 1024 * 1024):
    """SupConSegLoss forward.

    features: [B, 2, C, H, W] float, labels: [B, 2, H, W] int.
    num_classes: pass explicitly (= max label + 1) when calling under jit.
    """
    B, V, C, H, W = features.shape
    assert V == 2, "expected two views"

    # torch.split + cat over the two views
    feats = jnp.concatenate([features[:, 0], features[:, 1]], axis=0)   # [2B,C,H,W]
    labs = jnp.concatenate([labels[:, 0], labels[:, 1]], axis=0)        # [2B,H,W]

    # flatten pixels, feature vector last: row order (b, i, j)
    X = jnp.transpose(feats, (0, 2, 3, 1)).reshape(-1, C).astype(jnp.float32)
    L = labs.reshape(-1).astype(jnp.int32)                              # [N]
    N = X.shape[0]
    inv_temp = 1.0 / float(temperature)

    # ------------------------------------------------------------------ #
    # O(N*C) positives precompute in XLA (hoisted out of the N^2 kernel):#
    #   numerator_a = <x_a, sum_{k: L_k==L_a} x_k>/T - self_c_a          #
    #   n_pos_a     = |{k : L_k == L_a}|                                 #
    # ------------------------------------------------------------------ #
    if num_classes is None:
        num_classes = int(jnp.max(L)) + 1          # concrete labels only
    class_sum = jax.ops.segment_sum(X, L, num_segments=num_classes)        # [K,C]
    class_cnt = jax.ops.segment_sum(jnp.ones((N,), jnp.float32), L,
                                    num_segments=num_classes)              # [K]
    pos_sum = jnp.sum(X * class_sum[L], axis=1) * inv_temp                 # [N]
    n_pos = class_cnt[L]                                                   # [N]
    self_c = jnp.sum(X * X, axis=1) * inv_temp                             # [N]
    # NOTE: matches PyTorch: a valid anchor whose only positive is itself
    # (n_pos == 1) divides by zero, exactly like the original module.
    pos_term = (pos_sum - self_c) / (n_pos - 1.0)                          # [N]
    valid = (L != 0)                                                       # [N]

    # ------------------------------------------------------------------ #
    # Kernel operands.                                                   #
    # ------------------------------------------------------------------ #
    Xk = X.astype(matmul_dtype)                    # key features        [N, C]
    Xa = (X * inv_temp).astype(matmul_dtype)       # anchors, 1/T folded [N, C]
    # self-similarity from the SAME cast operands as the matmul so that
    # l - exp(sc - m) cannot go (numerically) negative under bf16 streaming.
    sc_mm = jnp.sum(Xk.astype(jnp.float32) * Xa.astype(jnp.float32), axis=1)

    # Clamp tiles for small problems; pad anchor / key axes independently.
    tm = max(128, min(tm, _round_up(N, 128)))
    assert tm % 128 == 0
    tn = _round_up(max(8, min(tn, _round_up(N, 8))), 8)
    N_a = _round_up(N, tm)            # padded anchor count (masked in wrapper)
    N_k = _round_up(N, tn)            # padded key count (corrected in kernel)
    n_pad_keys = N_k - N

    Xk_p = jnp.pad(Xk, ((0, N_k - N), (0, 0)))                # (N_k, C)
    XaT_p = jnp.pad(Xa, ((0, N_a - N), (0, 0))).T             # (C, N_a) lane-dense
    sc_row = jnp.pad(sc_mm, (0, N_a - N)).reshape(1, N_a)     # (1, N_a)

    grid = (N_a // tm, N_k // tn)
    kernel = functools.partial(_supcon_logden_kernel, n_pad_keys=n_pad_keys)

    itemsize = jnp.dtype(matmul_dtype).itemsize
    cost = pl.CostEstimate(
        flops=int(2 * N_a * N_k * C + 5 * N_a * N_k),
        transcendentals=int(N_a * N_k),
        bytes_accessed=int(itemsize * (N_k * C * grid[0] + N_a * C) + 4 * 2 * N_a),
    )

    log_den = pl.pallas_call(
        kernel,
        out_shape=jax.ShapeDtypeStruct((1, N_a), jnp.float32),
        grid_spec=pltpu.PrefetchScalarGridSpec(
            num_scalar_prefetch=0,
            grid=grid,
            in_specs=[
                # key features; re-fetched once per anchor tile -> traffic is
                # N_k * C * itemsize * (N_a / tm), the reason tm defaults large.
                # TODO(synk): add pipeline_mode=pl.Buffered(3) here if an xprof
                # trace on v5e shows exposed key-tile DMA.
                pl.BlockSpec((tn, C), lambda i, j: (j, 0)),
                pl.BlockSpec((C, tm), lambda i, j: (0, i)),    # anchors^T (i only)
                pl.BlockSpec((1, tm), lambda i, j: (0, i)),    # self-contrast row
            ],
            out_specs=pl.BlockSpec((1, tm), lambda i, j: (0, i)),
            scratch_shapes=[pltpu.VMEM((1, tm), jnp.float32)] * 2,   # m, l
        ),
        compiler_params=pltpu.CompilerParams(
            # anchor axis independent -> megacore sharding on v7x; key axis
            # carries the running accumulators -> arbitrary (sequential).
            dimension_semantics=("parallel", "arbitrary"),
            vmem_limit_bytes=vmem_limit_bytes,
        ),
        cost_estimate=cost,
    )(Xk_p, XaT_p, sc_row)

    log_den = log_den[0, :N]
    loss_per = jnp.where(valid, log_den - pos_term, 0.0)
    cnt = jnp.sum(valid.astype(jnp.float32))
    # PyTorch returns 0.0 when there are no valid anchors
    return jnp.where(cnt > 0, jnp.sum(loss_per) / jnp.maximum(cnt, 1.0), 0.0)


def _reference_loss(features, labels, temperature=0.7):
    """Pure-JAX reference mirroring the PyTorch loops (vectorized)."""
    B, V, C, H, W = features.shape
    feats = jnp.concatenate([features[:, 0], features[:, 1]], axis=0)
    labs = jnp.concatenate([labels[:, 0], labels[:, 1]], axis=0)
    X = jnp.transpose(feats, (0, 2, 3, 1)).reshape(-1, C).astype(jnp.float32)
    L = labs.reshape(-1).astype(jnp.int32)
    S = X @ X.T / temperature
    self_c = jnp.sum(X * X, axis=1) / temperature
    eq = (L[None, :] == L[:, None]).astype(jnp.float32)
    num = jnp.sum(eq * S, axis=1) - self_c
    den = jnp.sum(jnp.exp(S), axis=1) - jnp.exp(self_c)
    n_pos = jnp.sum(eq, axis=1)
    lp = jnp.log(den) - num / (n_pos - 1.0)
    valid = (L != 0)
    lp = jnp.where(valid, lp, 0.0)
    cnt = jnp.sum(valid.astype(jnp.float32))
    return jnp.where(cnt > 0, jnp.sum(lp) / jnp.maximum(cnt, 1.0), 0.0)


if __name__ == "__main__":
    key = jax.random.PRNGKey(0)
    kf, kl = jax.random.split(key)

    # small shapes: B=2, 2 views, C=4, H=W=8 -> N = 2*B*H*W = 256 pixels
    B, C, H, W = 2, 4, 8, 8
    features = jax.random.normal(kf, (B, 2, C, H, W), dtype=jnp.float32)
    # labels in {0, 1, 2}; 0 = background (skipped anchors)
    labels = jax.random.randint(kl, (B, 2, H, W), minval=0, maxval=3, dtype=jnp.int32)

    ref = _reference_loss(features, labels, temperature=0.7)

    # 1) production defaults (tiles clamp down to N=256 here, single-step grid)
    loss_default = supcon_seg_loss(features, labels, temperature=0.7,
                                   matmul_dtype=jnp.float32)
    loss_default = jax.block_until_ready(loss_default)
    assert jnp.allclose(loss_default, ref, rtol=1e-3, atol=1e-3), (loss_default, ref)

    # 2) small tiles: exercises the multi-step online log-sum-exp accumulation
    #    and the zero-padded-key correction (256 is not a multiple of tn=96)
    loss_small = supcon_seg_loss(features, labels, temperature=0.7,
                                 tm=128, tn=96, matmul_dtype=jnp.float32)
    loss_small = jax.block_until_ready(loss_small)
    assert jnp.allclose(loss_small, ref, rtol=1e-3, atol=1e-3), (loss_small, ref)

    print("KERNEL_OK")
</pallas_src>

<mosaic_0001>
module attributes {stable_mosaic.version = 11 : i64} {
  func.func @_supcon_logden_kernel(%arg0: i32, %arg1: i32, %arg2: memref<256x4xf32, #tpu.memory_space<vmem>>, %arg3: memref<4x256xf32, #tpu.memory_space<vmem>>, %arg4: memref<1x256xf32, #tpu.memory_space<vmem>>, %arg5: memref<1x256xf32, #tpu.memory_space<vmem>>, %arg6: memref<1x256xf32, #tpu.memory_space<vmem>>, %arg7: memref<1x256xf32, #tpu.memory_space<vmem>>) attributes {dimension_semantics = [#tpu.dimension_semantics<parallel>, #tpu.dimension_semantics<arbitrary>], iteration_bounds = array<i64: 1, 1>, scalar_prefetch = 0 : i64, scratch_operands = 2 : i64, tpu.core_type = #tpu.core_type<tc>, window_params = [{transform_indices = @transform_0, window_bounds = array<i64: 256, 4>}, {transform_indices = @transform_1, window_bounds = array<i64: 4, 256>}, {transform_indices = @transform_2, window_bounds = array<i64: 1, 256>}, {transform_indices = @transform_3, window_bounds = array<i64: 1, 256>}]} {
    %c0_i32 = arith.constant 0 : i32
    %0 = arith.cmpi eq, %arg1, %c0_i32 : i32
    %1 = arith.extui %0 : i1 to i32
    %c0_i32_0 = arith.constant 0 : i32
    %2 = arith.cmpi ne, %1, %c0_i32_0 : i32
    scf.if %2 {
      %cst_16 = arith.constant 0xFF800000 : f32
      %25 = vector.broadcast %cst_16 : f32 to vector<1x256xf32>
      %c0_17 = arith.constant 0 : index
      %c0_18 = arith.constant 0 : index
      %26 = vector.load %arg6[%c0_17, %c0_18] : memref<1x256xf32, #tpu.memory_space<vmem>>, vector<1x256xf32>
      tpu.vector_store %arg6[%c0_17, %c0_18], %25 {strides = array<i32>} : memref<1x256xf32, #tpu.memory_space<vmem>>, vector<1x256xf32>,
      %cst_19 = arith.constant 0.000000e+00 : f32
      %27 = vector.broadcast %cst_19 : f32 to vector<1x256xf32>
      %c0_20 = arith.constant 0 : index
      %c0_21 = arith.constant 0 : index
      %28 = vector.load %arg7[%c0_20, %c0_21] : memref<1x256xf32, #tpu.memory_space<vmem>>, vector<1x256xf32>
      tpu.vector_store %arg7[%c0_20, %c0_21], %27 {strides = array<i32>} : memref<1x256xf32, #tpu.memory_space<vmem>>, vector<1x256xf32>,
    } else {
    }
    %c0 = arith.constant 0 : index
    %c0_1 = arith.constant 0 : index
    %3 = vector.load %arg2[%c0, %c0_1] : memref<256x4xf32, #tpu.memory_space<vmem>>, vector<256x4xf32>
    %c0_2 = arith.constant 0 : index
    %c0_3 = arith.constant 0 : index
    %4 = vector.load %arg3[%c0_2, %c0_3] : memref<4x256xf32, #tpu.memory_space<vmem>>, vector<4x256xf32>
    %cst = arith.constant dense<0.000000e+00> : vector<256x256xf32>
    %5 = tpu.matmul %3, %4, %cst {dimension_numbers = #tpu.dot_dimension_numbers<[1], [0], [0], [1], [0, 0, 1, 1], [], []>} : vector<256x4xf32>, vector<4x256xf32>, vector<256x256xf32> -> vector<256x256xf32>
    %c0_4 = arith.constant 0 : index
    %c0_5 = arith.constant 0 : index
    %6 = vector.load %arg6[%c0_4, %c0_5] : memref<1x256xf32, #tpu.memory_space<vmem>>, vector<1x256xf32>
    %cst_6 = arith.constant dense<0xFF800000> : vector<256xf32>
    %7 = vector.multi_reduction <maximumf>, %5, %cst_6 [0] : vector<256x256xf32> to vector<256xf32>
    %8 = vector.shape_cast %7 : vector<256xf32> to vector<1x256xf32>
    %9 = arith.maximumf %6, %8 : vector<1x256xf32>
    %10 = vector.broadcast %9 : vector<1x256xf32> to vector<256x256xf32>
    %11 = arith.subf %5, %10 : vector<256x256xf32>
    %12 = math.exp %11 : vector<256x256xf32>
    %13 = arith.subf %6, %9 : vector<1x256xf32>
    %14 = math.exp %13 : vector<1x256xf32>
    %c0_7 = arith.constant 0 : index
    %c0_8 = arith.constant 0 : index
    %15 = vector.load %arg7[%c0_7, %c0_8] : memref<1x256xf32, #tpu.memory_space<vmem>>, vector<1x256xf32>
    %16 = arith.mulf %14, %15 : vector<1x256xf32>
    %cst_9 = arith.constant dense<0.000000e+00> : vector<256xf32>
    %17 = vector.multi_reduction <add>, %12, %cst_9 [0] : vector<256x256xf32> to vector<256xf32>
    %18 = vector.shape_cast %17 : vector<256xf32> to vector<1x256xf32>
    %19 = arith.addf %16, %18 : vector<1x256xf32>
    %c0_10 = arith.constant 0 : index
    %c0_11 = arith.constant 0 : index
    %20 = vector.load %arg7[%c0_10, %c0_11] : memref<1x256xf32, #tpu.memory_space<vmem>>, vector<1x256xf32>
    tpu.vector_store %arg7[%c0_10, %c0_11], %19 {strides = array<i32>} : memref<1x256xf32, #tpu.memory_space<vmem>>, vector<1x256xf32>,
    %c0_12 = arith.constant 0 : index
    %c0_13 = arith.constant 0 : index
    %21 = vector.load %arg6[%c0_12, %c0_13] : memref<1x256xf32, #tpu.memory_space<vmem>>, vector<1x256xf32>
    tpu.vector_store %arg6[%c0_12, %c0_13], %9 {strides = array<i32>} : memref<1x256xf32, #tpu.memory_space<vmem>>, vector<1x256xf32>,
    %c0_i32_14 = arith.constant 0 : i32
    %22 = arith.cmpi eq, %arg1, %c0_i32_14 : i32
    %23 = arith.extui %22 : i1 to i32
    %c0_i32_15 = arith.constant 0 : i32
    %24 = arith.cmpi ne, %23, %c0_i32_15 : i32
    scf.if %24 {
      %c0_16 = arith.constant 0 : index
      %c0_17 = arith.constant 0 : index
      %25 = vector.load %arg6[%c0_16, %c0_17] : memref<1x256xf32, #tpu.memory_space<vmem>>, vector<1x256xf32>
      %c0_18 = arith.constant 0 : index
      %c0_19 = arith.constant 0 : index
      %26 = vector.load %arg7[%c0_18, %c0_19] : memref<1x256xf32, #tpu.memory_space<vmem>>, vector<1x256xf32>
      %c0_20 = arith.constant 0 : index
      %c0_21 = arith.constant 0 : index
      %27 = vector.load %arg4[%c0_20, %c0_21] : memref<1x256xf32, #tpu.memory_space<vmem>>, vector<1x256xf32>
      %28 = arith.subf %27, %25 : vector<1x256xf32>
      %29 = math.exp %28 : vector<1x256xf32>
      %30 = arith.subf %26, %29 : vector<1x256xf32>
      %31 = math.log %30 : vector<1x256xf32>
      %32 = arith.addf %25, %31 : vector<1x256xf32>
      %c0_22 = arith.constant 0 : index
      %c0_23 = arith.constant 0 : index
      %33 = vector.load %arg5[%c0_22, %c0_23] : memref<1x256xf32, #tpu.memory_space<vmem>>, vector<1x256xf32>
      tpu.vector_store %arg5[%c0_22, %c0_23], %32 {strides = array<i32>} : memref<1x256xf32, #tpu.memory_space<vmem>>, vector<1x256xf32>,
    } else {
    }
    return
  }
  func.func @transform_0(%arg0: i32, %arg1: i32) -> (i32, i32) {
    %c0_i32 = arith.constant 0 : i32
    %c0_i32_0 = arith.constant 0 : i32
    return %arg1, %c0_i32 : i32, i32
  }
  func.func @transform_1(%arg0: i32, %arg1: i32) -> (i32, i32) {
    %c0_i32 = arith.constant 0 : i32
    %c0_i32_0 = arith.constant 0 : i32
    return %c0_i32, %arg0 : i32, i32
  }
  func.func @transform_2(%arg0: i32, %arg1: i32) -> (i32, i32) {
    %c0_i32 = arith.constant 0 : i32
    %c0_i32_0 = arith.constant 0 : i32
    return %c0_i32, %arg0 : i32, i32
  }
  func.func @transform_3(%arg0: i32, %arg1: i32) -> (i32, i32) {
    %c0_i32 = arith.constant 0 : i32
    %c0_i32_0 = arith.constant 0 : i32
    return %c0_i32, %arg0 : i32, i32
  }
}

</mosaic_0001>

<llo_original>
// kernel: tpu_custom_call.1
$region0: #{tpu_custom_call.1}
  #allocation0 [shape = 'u32[]', space=smem, size = 0x4, offset = 0x4, fixed_abs, tag = 'smem constant byte address 0x4 - core index']
  #allocation1 [shape = 'u32[144,128]{1,0:T(1,128)}', space=vmem, size = 0x12000, scoped, tag = 'internal scratch']
  #allocation2 [shape = 'f32[1,256]{1,0:T(1,128)}', space=vmem, size = 0x400, scoped, tag = 'scratch operand']
  #allocation3 [shape = 'f32[1,256]{1,0:T(1,128)}', space=vmem, size = 0x400, scoped, tag = 'scratch operand']
  %s0 = inlined_call_operand.vmem [shape: f32[256,4], index: 0, kind: input, shape index: {}]
  %s1 = inlined_call_operand.vmem [shape: f32[4,256], index: 1, kind: input, shape index: {}]
  %s2 = inlined_call_operand.vmem [shape: f32[1,256], index: 2, kind: input, shape index: {}]
  %s3 = inlined_call_operand.hbm [shape: f32[1,256], index: 3, kind: output, shape index: {}]
  %s4 = sld [smem:[#allocation0]]
  $region30: #{tpu_custom_call.1} parent=0
    _
  %s6 = ssub.s32 1, %s4
  %s7 = scalar_select 0, %s6, %s4
  $region1: #{tpu_custom_call.1} parent=0
    #allocation4 [shape = 'u8[1024]{0}', space=vmem, size = 0x400, scoped, tag = 'output window, operand 0, single buffered']
    #allocation5 [shape = 's32[1]{0}', space=sflag, size = 0x4, scoped, tag = 'scoped memory for tpu_custom_call.1']
    %8 = vsyncpa [#allocation5], 0
    // Predicated region
    $region2: #{tpu_custom_call.1} parent=1 // pred_check
      _
    $region3: #{tpu_custom_call.1} parent=1 // pred_check_branch
      %10 = sbr.rel (0) target = $region5
    $region4: #{tpu_custom_call.1} parent=1 // pred_region
      _
    $region5: #{tpu_custom_call.1} parent=1 // pred_fallthru
      _
    // Predicated region
    $region6: #{tpu_custom_call.1} parent=1 // pred_check
      _
    $region7: #{tpu_custom_call.1} parent=1 // pred_check_branch
      %12 = sbr.rel (0) target = $region9
    $region8: #{tpu_custom_call.1} parent=1 // pred_region
      _
    $region9: #{tpu_custom_call.1} parent=1 // pred_fallthru
      _
    // Predicated region
    $region10: #{tpu_custom_call.1} parent=1 // pred_check
      _
    $region11: #{tpu_custom_call.1} parent=1 // pred_check_branch
      %14 = sbr.rel (0) target = $region13
    $region12: #{tpu_custom_call.1} parent=1 // pred_region
      _
    $region13: #{tpu_custom_call.1} parent=1 // pred_fallthru
      _
    %p15 = scmp.eq.s32.totalorder 0, 0
    // Predicated region
    $region14: #{tpu_custom_call.1} parent=1 // pred_check
      %p16 = pneg %p15
    $region15: #{tpu_custom_call.1} parent=1 // pred_check_branch
      %18 = sbr.rel (%p16) target = $region17
    $region16: #{tpu_custom_call.1} parent=1 // pred_region
      %v19 = vlaneseq
      %vm20 = vcmp.ge.s32.totalorder %v19, 0
      %vm21 = vcmp.lt.s32.totalorder %v19, 256
      %vm22 = vmand %vm20, %vm21
      %23 = vst.msk [vmem:[#allocation2] sm:$0x3] %vm22, -inf
      %24 = vst.msk [vmem:[#allocation3] sm:$0x3] %vm22, 0.0
    $region17: #{tpu_custom_call.1} parent=1 // pred_fallthru
      _
    %v25 = vld [vmem:[%s0] sm:$0xff]
    %v26 = vld [vmem:[%s0 + $0x8] sm:$0xff]
    %v27 = vld [vmem:[%s0 + $0x10] sm:$0xff]
    %v28 = vld [vmem:[%s0 + $0x18] sm:$0xff]
    %v29 = vld [vmem:[%s0 + $0x20] sm:$0xff]
    %v30 = vld [vmem:[%s0 + $0x28] sm:$0xff]
    %v31 = vld [vmem:[%s0 + $0x30] sm:$0xff]
    %v32 = vld [vmem:[%s0 + $0x38] sm:$0xff]
    %v33 = vld [vmem:[%s0 + $0x40] sm:$0xff]
    %v34 = vld [vmem:[%s0 + $0x48] sm:$0xff]
    %v35 = vld [vmem:[%s0 + $0x50] sm:$0xff]
    %v36 = vld [vmem:[%s0 + $0x58] sm:$0xff]
    %v37 = vld [vmem:[%s0 + $0x60] sm:$0xff]
    %v38 = vld [vmem:[%s0 + $0x68] sm:$0xff]
    %v39 = vld [vmem:[%s0 + $0x70] sm:$0xff]
    %v40 = vld [vmem:[%s0 + $0x78] sm:$0xff]
    %v41 = vld [vmem:[%s0 + $0x80] sm:$0xff]
    %v42 = vld [vmem:[%s0 + $0x88] sm:$0xff]
    %v43 = vld [vmem:[%s0 + $0x90] sm:$0xff]
    %v44 = vld [vmem:[%s0 + $0x98] sm:$0xff]
    %v45 = vld [vmem:[%s0 + $0xa0] sm:$0xff]
    %v46 = vld [vmem:[%s0 + $0xa8] sm:$0xff]
    %v47 = vld [vmem:[%s0 + $0xb0] sm:$0xff]
    %v48 = vld [vmem:[%s0 + $0xb8] sm:$0xff]
    %v49 = vld [vmem:[%s0 + $0xc0] sm:$0xff]
    %v50 = vld [vmem:[%s0 + $0xc8] sm:$0xff]
    %v51 = vld [vmem:[%s0 + $0xd0] sm:$0xff]
    %v52 = vld [vmem:[%s0 + $0xd8] sm:$0xff]
    %v53 = vld [vmem:[%s0 + $0xe0] sm:$0xff]
    %v54 = vld [vmem:[%s0 + $0xe8] sm:$0xff]
    %v55 = vld [vmem:[%s0 + $0xf0] sm:$0xff]
    %v56 = vld [vmem:[%s0 + $0xf8] sm:$0xff]
    %v57 = vld [vmem:[%s1] sm:$0xff]
    %v59 = vcombine.high %v57, %v57
    %vm60 = vcmask 31744
    %v62 = vsel %vm60, %v25, 0
    %v65 = vsel %vm60, %v26, 0
    %v68 = vsel %vm60, %v27, 0
    %v71 = vsel %vm60, %v28, 0
    %v74 = vsel %vm60, %v29, 0
    %v77 = vsel %vm60, %v30, 0
    %v80 = vsel %vm60, %v31, 0
    %v83 = vsel %vm60, %v32, 0
    %v86 = vsel %vm60, %v33, 0
    %v89 = vsel %vm60, %v34, 0
    %v92 = vsel %vm60, %v35, 0
    %v95 = vsel %vm60, %v36, 0
    %v98 = vsel %vm60, %v37, 0
    %v101 = vsel %vm60, %v38, 0
    %v104 = vsel %vm60, %v39, 0
    %v107 = vsel %vm60, %v40, 0
    %v110 = vsel %vm60, %v41, 0
    %v113 = vsel %vm60, %v42, 0
    %v116 = vsel %vm60, %v43, 0
    %v119 = vsel %vm60, %v44, 0
    %v122 = vsel %vm60, %v45, 0
    %v125 = vsel %vm60, %v46, 0
    %v128 = vsel %vm60, %v47, 0
    %v131 = vsel %vm60, %v48, 0
    %v134 = vsel %vm60, %v49, 0
    %v137 = vsel %vm60, %v50, 0
    %v140 = vsel %vm60, %v51, 0
    %v143 = vsel %vm60, %v52, 0
    %v146 = vsel %vm60, %v53, 0
    %v149 = vsel %vm60, %v54, 0
    %v152 = vsel %vm60, %v55, 0
    %v155 = vsel %vm60, %v56, 0
    %vm157 = vcmask 1043456
    %v158 = vsel %vm157, %v57, 0
    %v160 = vsel %vm157, %v59, 0
    %162 = vmatprep.subr.mxu0 %v160
    %163 = vmatpush1.msra.mxu0 %v158
    %164 = vmatprep.subr.mxu0 0.0
    %165 = vmatpush1.msra.mxu0 0.0
    %166 = vmatprep.subr.mxu0 0.0
    %167 = vmatpush1.msra.mxu0 0.0
    %168 = vmatprep.subr.mxu0 0.0
    %169 = vmatpush1.msra.mxu0 0.0
    %170 = vmatprep.subr.mxu0 0.0
    %171 = vmatpush1.msra.mxu0 0.0
    %172 = vmatprep.subr.mxu0 0.0
    %173 = vmatpush1.msra.mxu0 0.0
    %174 = vmatprep.subr.mxu0 0.0
    %175 = vmatpush1.msra.mxu0 0.0
    %176 = vmatprep.subr.mxu0 0.0
    %177 = vmatpush1.msra.mxu0 0.0
    %178 = vmatprep.subr.mxu0 0.0
    %179 = vmatpush1.msra.mxu0 0.0
    %180 = vmatprep.subr.mxu0 0.0
    %181 = vmatpush1.msra.mxu0 0.0
    %182 = vmatprep.subr.mxu0 0.0
    %183 = vmatpush1.msra.mxu0 0.0
    %184 = vmatprep.subr.mxu0 0.0
    %185 = vmatpush1.msra.mxu0 0.0
    %186 = vmatprep.subr.mxu0 0.0
    %187 = vmatpush1.msra.mxu0 0.0
    %188 = vmatprep.subr.mxu0 0.0
    %189 = vmatpush1.msra.mxu0 0.0
    %190 = vmatprep.subr.mxu0 0.0
    %191 = vmatpush1.msra.mxu0 0.0
    %192 = vmatprep.subr.mxu0 0.0
    %193 = vmatpush1.msra.mxu0 0.0
    %194 = vmatprep.subr.mxu0 0.0
    %195 = vmatpush1.msra.mxu0 0.0
    %196 = vmatprep.subr.mxu0 0.0
    %197 = vmatpush1.msra.mxu0 0.0
    %198 = vmatprep.subr.mxu0 0.0
    %199 = vmatpush1.msra.mxu0 0.0
    %200 = vmatprep.subr.mxu0 0.0
    %201 = vmatpush1.msra.mxu0 0.0
    %202 = vmatprep.subr.mxu0 0.0
    %203 = vmatpush1.msra.mxu0 0.0
    %204 = vmatprep.subr.mxu0 0.0
    %205 = vmatpush1.msra.mxu0 0.0
    %206 = vmatprep.subr.mxu0 0.0
    %207 = vmatpush1.msra.mxu0 0.0
    %208 = vmatprep.subr.mxu0 0.0
    %209 = vmatpush1.msra.mxu0 0.0
    %210 = vmatprep.subr.mxu0 0.0
    %211 = vmatpush1.msra.mxu0 0.0
    %212 = vmatprep.subr.mxu0 0.0
    %213 = vmatpush1.msra.mxu0 0.0
    %214 = vmatprep.subr.mxu0 0.0
    %215 = vmatpush1.msra.mxu0 0.0
    %216 = vmatprep.subr.mxu0 0.0
    %217 = vmatpush1.msra.mxu0 0.0
    %218 = vmatprep.subr.mxu0 0.0
    %219 = vmatpush1.msra.mxu0 0.0
    %220 = vmatprep.subr.mxu0 0.0
    %221 = vmatpush1.msra.mxu0 0.0
    %222 = vmatprep.subr.mxu0 0.0
    %223 = vmatpush1.msra.mxu0 0.0
    %224 = vmatprep.subr.mxu0 0.0
    %225 = vmatpush1.msra.mxu0 0.0
    %226 = vmatprep.mubr.f32.mxu0 0.0
    %227 = vmatmul.mubr.f32.gmra.mrb[0].mxu0 %v62
    %v228 = vpop.f32.mrb[0].mxu0
    %v229 = vadd.f32 0.0, %v228
    %v230 = vpop.f32.mrb[0].mxu0
    %v231 = vadd.f32 0.0, %v230
    %232 = vmatprep.mubr.f32.mxu0 0.0
    %233 = vmatmul.mubr.f32.gmra.mrb[0].mxu0 %v65
    %v234 = vpop.f32.mrb[0].mxu0
    %v235 = vadd.f32 0.0, %v234
    %v236 = vpop.f32.mrb[0].mxu0
    %v237 = vadd.f32 0.0, %v236
    %238 = vmatprep.mubr.f32.mxu0 0.0
    %239 = vmatmul.mubr.f32.gmra.mrb[0].mxu0 %v68
    %v240 = vpop.f32.mrb[0].mxu0
    %v241 = vadd.f32 0.0, %v240
    %v242 = vpop.f32.mrb[0].mxu0
    %v243 = vadd.f32 0.0, %v242
    %244 = vmatprep.mubr.f32.mxu0 0.0
    %245 = vmatmul.mubr.f32.gmra.mrb[0].mxu0 %v71
    %v246 = vpop.f32.mrb[0].mxu0
    %v247 = vadd.f32 0.0, %v246
    %v248 = vpop.f32.mrb[0].mxu0
    %v249 = vadd.f32 0.0, %v248
    %250 = vmatprep.mubr.f32.mxu0 0.0
    %251 = vmatmul.mubr.f32.gmra.mrb[0].mxu0 %v74
    %v252 = vpop.f32.mrb[0].mxu0
    %v253 = vadd.f32 0.0, %v252
    %v254 = vpop.f32.mrb[0].mxu0
    %v255 = vadd.f32 0.0, %v254
    %256 = vmatprep.mubr.f32.mxu0 0.0
    %257 = vmatmul.mubr.f32.gmra.mrb[0].mxu0 %v77
    %v258 = vpop.f32.mrb[0].mxu0
    %v259 = vadd.f32 0.0, %v258
    %v260 = vpop.f32.mrb[0].mxu0
    %v261 = vadd.f32 0.0, %v260
    %262 = vmatprep.mubr.f32.mxu0 0.0
    %263 = vmatmul.mubr.f32.gmra.mrb[0].mxu0 %v80
    %v264 = vpop.f32.mrb[0].mxu0
    %v265 = vadd.f32 0.0, %v264
    %v266 = vpop.f32.mrb[0].mxu0
    %v267 = vadd.f32 0.0, %v266
    %268 = vmatprep.mubr.f32.mxu0 0.0
    %269 = vmatmul.mubr.f32.gmra.mrb[0].mxu0 %v83
    %v270 = vpop.f32.mrb[0].mxu0
    %v271 = vadd.f32 0.0, %v270
    %v272 = vpop.f32.mrb[0].mxu0
    %v273 = vadd.f32 0.0, %v272
    %274 = vmatprep.mubr.f32.mxu0 0.0
    %275 = vmatmul.mubr.f32.gmra.mrb[0].mxu0 %v86
    %v276 = vpop.f32.mrb[0].mxu0
    %v277 = vadd.f32 0.0, %v276
    %v278 = vpop.f32.mrb[0].mxu0
    %v279 = vadd.f32 0.0, %v278
    %280 = vmatprep.mubr.f32.mxu0 0.0
    %281 = vmatmul.mubr.f32.gmra.mrb[0].mxu0 %v89
    %v282 = vpop.f32.mrb[0].mxu0
    %v283 = vadd.f32 0.0, %v282
    %v284 = vpop.f32.mrb[0].mxu0
    %v285 = vadd.f32 0.0, %v284
    %286 = vmatprep.mubr.f32.mxu0 0.0
    %287 = vmatmul.mubr.f32.gmra.mrb[0].mxu0 %v92
    %v288 = vpop.f32.mrb[0].mxu0
    %v289 = vadd.f32 0.0, %v288
    %v290 = vpop.f32.mrb[0].mxu0
    %v291 = vadd.f32 0.0, %v290
    %292 = vmatprep.mubr.f32.mxu0 0.0
    %293 = vmatmul.mubr.f32.gmra.mrb[0].mxu0 %v95
    %v294 = vpop.f32.mrb[0].mxu0
    %v295 = vadd.f32 0.0, %v294
    %v296 = vpop.f32.mrb[0].mxu0
    %v297 = vadd.f32 0.0, %v296
    %298 = vmatprep.mubr.f32.mxu0 0.0
    %299 = vmatmul.mubr.f32.gmra.mrb[0].mxu0 %v98
    %v300 = vpop.f32.mrb[0].mxu0
    %v301 = vadd.f32 0.0, %v300
    %v302 = vpop.f32.mrb[0].mxu0
    %v303 = vadd.f32 0.0, %v302
    %304 = vmatprep.mubr.f32.mxu0 0.0
    %305 = vmatmul.mubr.f32.gmra.mrb[0].mxu0 %v101
    %v306 = vpop.f32.mrb[0].mxu0
    %v307 = vadd.f32 0.0, %v306
    %v308 = vpop.f32.mrb[0].mxu0
    %v309 = vadd.f32 0.0, %v308
    %310 = vmatprep.mubr.f32.mxu0 0.0
    %311 = vmatmul.mubr.f32.gmra.mrb[0].mxu0 %v104
    %v312 = vpop.f32.mrb[0].mxu0
    %v313 = vadd.f32 0.0, %v312
    %v314 = vpop.f32.mrb[0].mxu0
    %v315 = vadd.f32 0.0, %v314
    %316 = vmatprep.mubr.f32.mxu0 0.0
    %317 = vmatmul.mubr.f32.gmra.mrb[0].mxu0 %v107
    %v318 = vpop.f32.mrb[0].mxu0
    %v319 = vadd.f32 0.0, %v318
    %v320 = vpop.f32.mrb[0].mxu0
    %v321 = vadd.f32 0.0, %v320
    %322 = vmatprep.mubr.f32.mxu0 0.0
    %323 = vmatmul.mubr.f32.gmra.mrb[0].mxu0 %v110
    %v324 = vpop.f32.mrb[0].mxu0
    %v325 = vadd.f32 0.0, %v324
    %v326 = vpop.f32.mrb[0].mxu0
    %v327 = vadd.f32 0.0, %v326
    %328 = vmatprep.mubr.f32.mxu0 0.0
    %329 = vmatmul.mubr.f32.gmra.mrb[0].mxu0 %v113
    %v330 = vpop.f32.mrb[0].mxu0
    %v331 = vadd.f32 0.0, %v330
    %v332 = vpop.f32.mrb[0].mxu0
    %v333 = vadd.f32 0.0, %v332
    %334 = vmatprep.mubr.f32.mxu0 0.0
    %335 = vmatmul.mubr.f32.gmra.mrb[0].mxu0 %v116
    %v336 = vpop.f32.mrb[0].mxu0
    %v337 = vadd.f32 0.0, %v336
    %v338 = vpop.f32.mrb[0].mxu0
    %v339 = vadd.f32 0.0, %v338
    %340 = vmatprep.mubr.f32.mxu0 0.0
    %341 = vmatmul.mubr.f32.gmra.mrb[0].mxu0 %v119
    %v342 = vpop.f32.mrb[0].mxu0
    %v343 = vadd.f32 0.0, %v342
    %v344 = vpop.f32.mrb[0].mxu0
    %v345 = vadd.f32 0.0, %v344
    %346 = vmatprep.mubr.f32.mxu0 0.0
    %347 = vmatmul.mubr.f32.gmra.mrb[0].mxu0 %v122
    %v348 = vpop.f32.mrb[0].mxu0
    %v349 = vadd.f32 0.0, %v348
    %v350 = vpop.f32.mrb[0].mxu0
    %v351 = vadd.f32 0.0, %v350
    %352 = vmatprep.mubr.f32.mxu0 0.0
    %353 = vmatmul.mubr.f32.gmra.mrb[0].mxu0 %v125
    %v354 = vpop.f32.mrb[0].mxu0
    %v355 = vadd.f32 0.0, %v354
    %v356 = vpop.f32.mrb[0].mxu0
    %v357 = vadd.f32 0.0, %v356
    %358 = vmatprep.mubr.f32.mxu0 0.0
    %359 = vmatmul.mubr.f32.gmra.mrb[0].mxu0 %v128
    %v360 = vpop.f32.mrb[0].mxu0
    %v361 = vadd.f32 0.0, %v360
    %v362 = vpop.f32.mrb[0].mxu0
    %v363 = vadd.f32 0.0, %v362
    %364 = vmatprep.mubr.f32.mxu0 0.0
    %365 = vmatmul.mubr.f32.gmra.mrb[0].mxu0 %v131
    %v366 = vpop.f32.mrb[0].mxu0
    %v367 = vadd.f32 0.0, %v366
    %v368 = vpop.f32.mrb[0].mxu0
    %v369 = vadd.f32 0.0, %v368
    %370 = vmatprep.mubr.f32.mxu0 0.0
    %371 = vmatmul.mubr.f32.gmra.mrb[0].mxu0 %v134
    %v372 = vpop.f32.mrb[0].mxu0
    %v373 = vadd.f32 0.0, %v372
    %v374 = vpop.f32.mrb[0].mxu0
    %v375 = vadd.f32 0.0, %v374
    %376 = vmatprep.mubr.f32.mxu0 0.0
    %377 = vmatmul.mubr.f32.gmra.mrb[0].mxu0 %v137
    %v378 = vpop.f32.mrb[0].mxu0
    %v379 = vadd.f32 0.0, %v378
    %v380 = vpop.f32.mrb[0].mxu0
    %v381 = vadd.f32 0.0, %v380
    %382 = vmatprep.mubr.f32.mxu0 0.0
    %383 = vmatmul.mubr.f32.gmra.mrb[0].mxu0 %v140
    %v384 = vpop.f32.mrb[0].mxu0
    %v385 = vadd.f32 0.0, %v384
    %v386 = vpop.f32.mrb[0].mxu0
    %v387 = vadd.f32 0.0, %v386
    %388 = vmatprep.mubr.f32.mxu0 0.0
    %389 = vmatmul.mubr.f32.gmra.mrb[0].mxu0 %v143
    %v390 = vpop.f32.mrb[0].mxu0
    %v391 = vadd.f32 0.0, %v390
    %v392 = vpop.f32.mrb[0].mxu0
    %v393 = vadd.f32 0.0, %v392
    %394 = vmatprep.mubr.f32.mxu0 0.0
    %395 = vmatmul.mubr.f32.gmra.mrb[0].mxu0 %v146
    %v396 = vpop.f32.mrb[0].mxu0
    %v397 = vadd.f32 0.0, %v396
    %v398 = vpop.f32.mrb[0].mxu0
    %v399 = vadd.f32 0.0, %v398
    %400 = vmatprep.mubr.f32.mxu0 0.0
    %401 = vmatmul.mubr.f32.gmra.mrb[0].mxu0 %v149
    %v402 = vpop.f32.mrb[0].mxu0
    %v403 = vadd.f32 0.0, %v402
    %v404 = vpop.f32.mrb[0].mxu0
    %v405 = vadd.f32 0.0, %v404
    %406 = vmatprep.mubr.f32.mxu0 0.0
    %407 = vmatmul.mubr.f32.gmra.mrb[0].mxu0 %v152
    %v408 = vpop.f32.mrb[0].mxu0
    %v409 = vadd.f32 0.0, %v408
    %v410 = vpop.f32.mrb[0].mxu0
    %v411 = vadd.f32 0.0, %v410
    %412 = vmatprep.mubr.f32.mxu0 0.0
    %413 = vmatmul.mubr.f32.gmra.mrb[0].mxu0 %v155
    %v414 = vpop.f32.mrb[0].mxu0
    %v415 = vadd.f32 0.0, %v414
    %v416 = vpop.f32.mrb[0].mxu0
    %v417 = vadd.f32 0.0, %v416
    %418 = vdwg.mxu0
    %v419 = vld [vmem:[#allocation2] sm:$0x3]
    %v420 = vmax.f32 %v229, %v241
    %v421 = vmax.f32 %v235, %v247
    %v422 = vmax.f32 %v420, %v253
    %v423 = vmax.f32 %v421, %v259
    %v424 = vmax.f32 %v422, %v265
    %v425 = vmax.f32 %v423, %v271
    %v426 = vmax.f32 %v424, %v277
    %v427 = vmax.f32 %v425, %v283
    %v428 = vmax.f32 %v426, %v289
    %v429 = vmax.f32 %v427, %v295
    %v430 = vmax.f32 %v428, %v301
    %v431 = vmax.f32 %v429, %v307
    %v432 = vmax.f32 %v430, %v313
    %v433 = vmax.f32 %v431, %v319
    %v434 = vmax.f32 %v432, %v325
    %v435 = vmax.f32 %v433, %v331
    %v436 = vmax.f32 %v434, %v337
    %v437 = vmax.f32 %v435, %v343
    %v438 = vmax.f32 %v436, %v349
    %v439 = vmax.f32 %v437, %v355
    %v440 = vmax.f32 %v438, %v361
    %v441 = vmax.f32 %v439, %v367
    %v442 = vmax.f32 %v440, %v373
    %v443 = vmax.f32 %v441, %v379
    %v444 = vmax.f32 %v442, %v385
    %v445 = vmax.f32 %v443, %v391
    %v446 = vmax.f32 %v444, %v397
    %v447 = vmax.f32 %v445, %v403
    %v448 = vmax.f32 %v446, %v409
    %v449 = vmax.f32 %v447, %v415
    %v450 = vmax.f32 %v448, %v449
    %v451 = vrot.slane %v450, 4
    %v452 = vmax.f32 %v450, %v451
    %v453 = vrot.slane %v452, 2
    %v454 = vmax.f32 %v452, %v453
    %v455 = vrot.slane %v454, 1
    %v456 = vmax.f32 %v454, %v455
    %v457 = vmax.f32 %v231, %v243
    %v458 = vmax.f32 %v237, %v249
    %v459 = vmax.f32 %v457, %v255
    %v460 = vmax.f32 %v458, %v261
    %v461 = vmax.f32 %v459, %v267
    %v462 = vmax.f32 %v460, %v273
    %v463 = vmax.f32 %v461, %v279
    %v464 = vmax.f32 %v462, %v285
    %v465 = vmax.f32 %v463, %v291
    %v466 = vmax.f32 %v464, %v297
    %v467 = vmax.f32 %v465, %v303
    %v468 = vmax.f32 %v466, %v309
    %v469 = vmax.f32 %v467, %v315
    %v470 = vmax.f32 %v468, %v321
    %v471 = vmax.f32 %v469, %v327
    %v472 = vmax.f32 %v470, %v333
    %v473 = vmax.f32 %v471, %v339
    %v474 = vmax.f32 %v472, %v345
    %v475 = vmax.f32 %v473, %v351
    %v476 = vmax.f32 %v474, %v357
    %v477 = vmax.f32 %v475, %v363
    %v478 = vmax.f32 %v476, %v369
    %v479 = vmax.f32 %v477, %v375
    %v480 = vmax.f32 %v478, %v381
    %v481 = vmax.f32 %v479, %v387
    %v482 = vmax.f32 %v480, %v393
    %v483 = vmax.f32 %v481, %v399
    %v484 = vmax.f32 %v482, %v405
    %v485 = vmax.f32 %v483, %v411
    %v486 = vmax.f32 %v484, %v417
    %v487 = vmax.f32 %v485, %v486
    %v488 = vrot.slane %v487, 4
    %v489 = vmax.f32 %v487, %v488
    %v490 = vrot.slane %v489, 2
    %v491 = vmax.f32 %v489, %v490
    %v492 = vrot.slane %v491, 1
    %v493 = vmax.f32 %v491, %v492
    %v496 = vcombine.low %v456, %v493
    %v498 = vunpack.c.l.s4 1966171168
    %v499 = vunpack.c.0.s8 %v498
    %v500 = vlaneseq
    %v501 = vshrl.u32 %v500, 7
    %v502 = vsub.s32 %v499, %v501
    %v503 = vrot.slane %v496, %v502
    %v505 = vunpack.c.l.s4 1966171168
    %v506 = vunpack.c.0.s8 %v505
    %v507 = vlaneseq
    %v508 = vshrl.u32 %v507, 7
    %v509 = vsub.s32 %v506, %v508
    %v510 = vrot.slane %v503, %v509
    %v512 = vmax.f32 %v419, %v510
    %v514 = vlaneseq
    %v515 = vshrl.u32 %v514, 7
    %v516 = vsub.s32 0, %v515
    %v517 = vrot.slane %v512, %v516
    %v518 = vlaneseq
    %v519 = vshrl.u32 %v518, 7
    %v520 = vsub.s32 1, %v519
    %v521 = vrot.slane %v512, %v520
    %v524 = vsub.f32 %v229, %v517
    %v525 = vsub.f32 %v231, %v521
    %v526 = vsub.f32 %v235, %v517
    %v527 = vsub.f32 %v237, %v521
    %v528 = vsub.f32 %v241, %v517
    %v529 = vsub.f32 %v243, %v521
    %v530 = vsub.f32 %v247, %v517
    %v531 = vsub.f32 %v249, %v521
    %v532 = vsub.f32 %v253, %v517
    %v533 = vsub.f32 %v255, %v521
    %v534 = vsub.f32 %v259, %v517
    %v535 = vsub.f32 %v261, %v521
    %v536 = vsub.f32 %v265, %v517
    %v537 = vsub.f32 %v267, %v521
    %v538 = vsub.f32 %v271, %v517
    %v539 = vsub.f32 %v273, %v521
    %v540 = vsub.f32 %v277, %v517
    %v541 = vsub.f32 %v279, %v521
    %v542 = vsub.f32 %v283, %v517
    %v543 = vsub.f32 %v285, %v521
    %v544 = vsub.f32 %v289, %v517
    %v545 = vsub.f32 %v291, %v521
    %v546 = vsub.f32 %v295, %v517
    %v547 = vsub.f32 %v297, %v521
    %v548 = vsub.f32 %v301, %v517
    %v549 = vsub.f32 %v303, %v521
    %v550 = vsub.f32 %v307, %v517
    %v551 = vsub.f32 %v309, %v521
    %v552 = vsub.f32 %v313, %v517
    %v553 = vsub.f32 %v315, %v521
    %v554 = vsub.f32 %v319, %v517
    %v555 = vsub.f32 %v321, %v521
    %v556 = vsub.f32 %v325, %v517
    %v557 = vsub.f32 %v327, %v521
    %v558 = vsub.f32 %v331, %v517
    %v559 = vsub.f32 %v333, %v521
    %v560 = vsub.f32 %v337, %v517
    %v561 = vsub.f32 %v339, %v521
    %v562 = vsub.f32 %v343, %v517
    %v563 = vsub.f32 %v345, %v521
    %v564 = vsub.f32 %v349, %v517
    %v565 = vsub.f32 %v351, %v521
    %v566 = vsub.f32 %v355, %v517
    %v567 = vsub.f32 %v357, %v521
    %v568 = vsub.f32 %v361, %v517
    %v569 = vsub.f32 %v363, %v521
    %v570 = vsub.f32 %v367, %v517
    %v571 = vsub.f32 %v369, %v521
    %v572 = vsub.f32 %v373, %v517
    %v573 = vsub.f32 %v375, %v521
    %v574 = vsub.f32 %v379, %v517
    %v575 = vsub.f32 %v381, %v521
    %v576 = vsub.f32 %v385, %v517
    %v577 = vsub.f32 %v387, %v521
    %v578 = vsub.f32 %v391, %v517
    %v579 = vsub.f32 %v393, %v521
    %v580 = vsub.f32 %v397, %v517
    %v581 = vsub.f32 %v399, %v521
    %v582 = vsub.f32 %v403, %v517
    %v583 = vsub.f32 %v405, %v521
    %v584 = vsub.f32 %v409, %v517
    %v585 = vsub.f32 %v411, %v521
    %v586 = vsub.f32 %v415, %v517
    %v587 = vsub.f32 %v417, %v521
    %v588 = vmul.f32 %v524, 1.442695
    %v589 = vpow.pop %v588
    %v590 = vmul.f32 %v525, 1.442695
    %v591 = vpow.pop %v590
    %v592 = vmul.f32 %v526, 1.442695
    %v593 = vpow.pop %v592
    %v594 = vmul.f32 %v527, 1.442695
    %v595 = vpow.pop %v594
    %v596 = vmul.f32 %v528, 1.442695
    %v597 = vpow.pop %v596
    %v598 = vmul.f32 %v529, 1.442695
    %v599 = vpow.pop %v598
    %v600 = vmul.f32 %v530, 1.442695
    %v601 = vpow.pop %v600
    %v602 = vmul.f32 %v531, 1.442695
    %v603 = vpow.pop %v602
    %v604 = vmul.f32 %v532, 1.442695
    %v605 = vpow.pop %v604
    %v606 = vmul.f32 %v533, 1.442695
    %v607 = vpow.pop %v606
    %v608 = vmul.f32 %v534, 1.442695
    %v609 = vpow.pop %v608
    %v610 = vmul.f32 %v535, 1.442695
    %v611 = vpow.pop %v610
    %v612 = vmul.f32 %v536, 1.442695
    %v613 = vpow.pop %v612
    %v614 = vmul.f32 %v537, 1.442695
    %v615 = vpow.pop %v614
    %v616 = vmul.f32 %v538, 1.442695
    %v617 = vpow.pop %v616
    %v618 = vmul.f32 %v539, 1.442695
    %v619 = vpow.pop %v618
    %v620 = vmul.f32 %v540, 1.442695
    %v621 = vpow.pop %v620
    %v622 = vmul.f32 %v541, 1.442695
    %v623 = vpow.pop %v622
    %v624 = vmul.f32 %v542, 1.442695
    %v625 = vpow.pop %v624
    %v626 = vmul.f32 %v543, 1.442695
    %v627 = vpow.pop %v626
    %v628 = vmul.f32 %v544, 1.442695
    %v629 = vpow.pop %v628
    %v630 = vmul.f32 %v545, 1.442695
    %v631 = vpow.pop %v630
    %v632 = vmul.f32 %v546, 1.442695
    %v633 = vpow.pop %v632
    %v634 = vmul.f32 %v547, 1.442695
    %v635 = vpow.pop %v634
    %v636 = vmul.f32 %v548, 1.442695
    %v637 = vpow.pop %v636
    %v638 = vmul.f32 %v549, 1.442695
    %v639 = vpow.pop %v638
    %v640 = vmul.f32 %v550, 1.442695
    %v641 = vpow.pop %v640
    %v642 = vmul.f32 %v551, 1.442695
    %v643 = vpow.pop %v642
    %v644 = vmul.f32 %v552, 1.442695
    %v645 = vpow.pop %v644
    %v646 = vmul.f32 %v553, 1.442695
    %v647 = vpow.pop %v646
    %v648 = vmul.f32 %v554, 1.442695
    %v649 = vpow.pop %v648
    %v650 = vmul.f32 %v555, 1.442695
    %v651 = vpow.pop %v650
    %v652 = vmul.f32 %v556, 1.442695
    %v653 = vpow.pop %v652
    %v654 = vmul.f32 %v557, 1.442695
    %v655 = vpow.pop %v654
    %v656 = vmul.f32 %v558, 1.442695
    %v657 = vpow.pop %v656
    %v658 = vmul.f32 %v559, 1.442695
    %v659 = vpow.pop %v658
    %v660 = vmul.f32 %v560, 1.442695
    %v661 = vpow.pop %v660
    %v662 = vmul.f32 %v561, 1.442695
    %v663 = vpow.pop %v662
    %v664 = vmul.f32 %v562, 1.442695
    %v665 = vpow.pop %v664
    %v666 = vmul.f32 %v563, 1.442695
    %v667 = vpow.pop %v666
    %v668 = vmul.f32 %v564, 1.442695
    %v669 = vpow.pop %v668
    %v670 = vmul.f32 %v565, 1.442695
    %v671 = vpow.pop %v670
    %v672 = vmul.f32 %v566, 1.442695
    %v673 = vpow.pop %v672
    %v674 = vmul.f32 %v567, 1.442695
    %v675 = vpow.pop %v674
    %v676 = vmul.f32 %v568, 1.442695
    %v677 = vpow.pop %v676
    %v678 = vmul.f32 %v569, 1.442695
    %v679 = vpow.pop %v678
    %v680 = vmul.f32 %v570, 1.442695
    %v681 = vpow.pop %v680
    %v682 = vmul.f32 %v571, 1.442695
    %v683 = vpow.pop %v682
    %v684 = vmul.f32 %v572, 1.442695
    %v685 = vpow.pop %v684
    %v686 = vmul.f32 %v573, 1.442695
    %v687 = vpow.pop %v686
    %v688 = vmul.f32 %v574, 1.442695
    %v689 = vpow.pop %v688
    %v690 = vmul.f32 %v575, 1.442695
    %v691 = vpow.pop %v690
    %v692 = vmul.f32 %v576, 1.442695
    %v693 = vpow.pop %v692
    %v694 = vmul.f32 %v577, 1.442695
    %v695 = vpow.pop %v694
    %v696 = vmul.f32 %v578, 1.442695
    %v697 = vpow.pop %v696
    %v698 = vmul.f32 %v579, 1.442695
    %v699 = vpow.pop %v698
    %v700 = vmul.f32 %v580, 1.442695
    %v701 = vpow.pop %v700
    %v702 = vmul.f32 %v581, 1.442695
    %v703 = vpow.pop %v702
    %v704 = vmul.f32 %v582, 1.442695
    %v705 = vpow.pop %v704
    %v706 = vmul.f32 %v583, 1.442695
    %v707 = vpow.pop %v706
    %v708 = vmul.f32 %v584, 1.442695
    %v709 = vpow.pop %v708
    %v710 = vmul.f32 %v585, 1.442695
    %v711 = vpow.pop %v710
    %v712 = vmul.f32 %v586, 1.442695
    %v713 = vpow.pop %v712
    %v714 = vmul.f32 %v587, 1.442695
    %v715 = vpow.pop %v714
    %v716 = vsub.f32 %v419, %v512
    %v717 = vmul.f32 %v716, 1.442695
    %v718 = vpow.pop %v717
    %v719 = vld [vmem:[#allocation3] sm:$0x3]
    %v720 = vmul.f32 %v718, %v719
    %v721 = vadd.f32 %v589, %v593
    %v722 = vadd.f32 %v721, %v597
    %v723 = vadd.f32 %v722, %v601
    %v724 = vadd.f32 %v723, %v605
    %v725 = vadd.f32 %v724, %v609
    %v726 = vadd.f32 %v725, %v613
    %v727 = vadd.f32 %v726, %v617
    %v728 = vadd.f32 %v727, %v621
    %v729 = vadd.f32 %v728, %v625
    %v730 = vadd.f32 %v729, %v629
    %v731 = vadd.f32 %v730, %v633
    %v732 = vadd.f32 %v731, %v637
    %v733 = vadd.f32 %v732, %v641
    %v734 = vadd.f32 %v733, %v645
    %v735 = vadd.f32 %v734, %v649
    %v736 = vadd.f32 %v735, %v653
    %v737 = vadd.f32 %v736, %v657
    %v738 = vadd.f32 %v737, %v661
    %v739 = vadd.f32 %v738, %v665
    %v740 = vadd.f32 %v739, %v669
    %v741 = vadd.f32 %v740, %v673
    %v742 = vadd.f32 %v741, %v677
    %v743 = vadd.f32 %v742, %v681
    %v744 = vadd.f32 %v743, %v685
    %v745 = vadd.f32 %v744, %v689
    %v746 = vadd.f32 %v745, %v693
    %v747 = vadd.f32 %v746, %v697
    %v748 = vadd.f32 %v747, %v701
    %v749 = vadd.f32 %v748, %v705
    %v750 = vadd.f32 %v749, %v709
    %v751 = vadd.f32 %v750, %v713
    %v752 = vrot.slane %v751, 4
    %v753 = vadd.f32 %v751, %v752
    %v754 = vrot.slane %v753, 2
    %v755 = vadd.f32 %v753, %v754
    %v756 = vrot.slane %v755, 1
    %v757 = vadd.f32 %v755, %v756
    %v758 = vadd.f32 %v591, %v595
    %v759 = vadd.f32 %v758, %v599
    %v760 = vadd.f32 %v759, %v603
    %v761 = vadd.f32 %v760, %v607
    %v762 = vadd.f32 %v761, %v611
    %v763 = vadd.f32 %v762, %v615
    %v764 = vadd.f32 %v763, %v619
    %v765 = vadd.f32 %v764, %v623
    %v766 = vadd.f32 %v765, %v627
    %v767 = vadd.f32 %v766, %v631
    %v768 = vadd.f32 %v767, %v635
    %v769 = vadd.f32 %v768, %v639
    %v770 = vadd.f32 %v769, %v643
    %v771 = vadd.f32 %v770, %v647
    %v772 = vadd.f32 %v771, %v651
    %v773 = vadd.f32 %v772, %v655
    %v774 = vadd.f32 %v773, %v659
    %v775 = vadd.f32 %v774, %v663
    %v776 = vadd.f32 %v775, %v667
    %v777 = vadd.f32 %v776, %v671
    %v778 = vadd.f32 %v777, %v675
    %v779 = vadd.f32 %v778, %v679
    %v780 = vadd.f32 %v779, %v683
    %v781 = vadd.f32 %v780, %v687
    %v782 = vadd.f32 %v781, %v691
    %v783 = vadd.f32 %v782, %v695
    %v784 = vadd.f32 %v783, %v699
    %v785 = vadd.f32 %v784, %v703
    %v786 = vadd.f32 %v785, %v707
    %v787 = vadd.f32 %v786, %v711
    %v788 = vadd.f32 %v787, %v715
    %v789 = vrot.slane %v788, 4
    %v790 = vadd.f32 %v788, %v789
    %v791 = vrot.slane %v790, 2
    %v792 = vadd.f32 %v790, %v791
    %v793 = vrot.slane %v792, 1
    %v794 = vadd.f32 %v792, %v793
    %v797 = vcombine.low %v757, %v794
    %v799 = vunpack.c.l.s4 1966171168
    %v800 = vunpack.c.0.s8 %v799
    %v801 = vlaneseq
    %v802 = vshrl.u32 %v801, 7
    %v803 = vsub.s32 %v800, %v802
    %v804 = vrot.slane %v797, %v803
    %v806 = vunpack.c.l.s4 1966171168
    %v807 = vunpack.c.0.s8 %v806
    %v808 = vlaneseq
    %v809 = vshrl.u32 %v808, 7
    %v810 = vsub.s32 %v807, %v809
    %v811 = vrot.slane %v804, %v810
    %v813 = vadd.f32 %v720, %v811
    %v814 = vlaneseq
    %vm815 = vcmp.ge.s32.totalorder %v814, 0
    %vm816 = vcmp.lt.s32.totalorder %v814, 256
    %vm817 = vmand %vm815, %vm816
    %818 = vst.msk [vmem:[#allocation3] sm:$0x3] %vm817, %v813
    %819 = vst.msk [vmem:[#allocation2] sm:$0x3] %vm817, %v512
    // Predicated region
    $region18: #{tpu_custom_call.1} parent=1 // pred_check
      %p820 = pneg %p15
    $region19: #{tpu_custom_call.1} parent=1 // pred_check_branch
      %822 = sbr.rel (%p820) target = $region21
    $region20: #{tpu_custom_call.1} parent=1 // pred_region
      %v823 = vld [vmem:[#allocation2] sm:$0x3]
      %v824 = vld [vmem:[#allocation3] sm:$0x3]
      %v825 = vld [vmem:[%s2] sm:$0x3]
      %v826 = vsub.f32 %v825, %v823
      %v827 = vmul.f32 %v826, 1.442695
      %v828 = vpow.pop %v827
      %v829 = vsub.f32 %v824, %v828
      %v830 = vlog2.pop %v829
      %v831 = vmul.f32 %v830, 0.6931472
      %v832 = vadd.f32 %v823, %v831
      %833 = vst.msk [vmem:[#allocation4] sm:$0x3] %vm817, %v832
    $region21: #{tpu_custom_call.1} parent=1 // pred_fallthru
      _
    // Predicated region
    $region22: #{tpu_custom_call.1} parent=1 // pred_check
      _
    $region23: #{tpu_custom_call.1} parent=1 // pred_check_branch
      %835 = sbr.rel (0) target = $region25
    $region24: #{tpu_custom_call.1} parent=1 // pred_region
      %s837 = ssub.s32 32, 32
      %838 = vsyncadd [#allocation5], %s837
      %s840 = sshll.u32 [#allocation4], 4
      %s841 = int_to_ptr.vmem [resolvable:$true] %s840
      %843 = dma.vmem_to_hbm [thread:$0]  %s841, 32, %s3, [#allocation5]
    $region25: #{tpu_custom_call.1} parent=1 // pred_fallthru
      _
    // Predicated region
    $region26: #{tpu_custom_call.1} parent=1 // pred_check
      _
    $region27: #{tpu_custom_call.1} parent=1 // pred_check_branch
      %845 = sbr.rel (0) target = $region29
    $region28: #{tpu_custom_call.1} parent=1 // pred_region
      %846 = dma.done [#allocation5], 32
    $region29: #{tpu_custom_call.1} parent=1 // pred_fallthru
      _
    %847 = vsyncpa [#allocation5], 1

</llo_original>
